<compile_context>
chip_gen: v5e
topology: v5e:2x2
jax: 0.10.0
libtpu: 0.0.40
codegen_flags: <defaults>
</compile_context>

<pallas_src>
import jax
import jax.numpy as jnp
from jax.experimental import pallas as pl
from jax.experimental.pallas import tpu as pltpu

MARGIN = 5.0
EPS = 1e-9
# inclass_margin_ratio from __init__ is unused in forward(); nothing to compute.


def _contrastive_loss_kernel(o1_ref, o2_ref, tgt_ref, out_ref):
    # Widen to f32 in-kernel: HBM traffic stays at the native embedding width,
    # while the squared-difference reduction over D is accumulated in f32.
    o1 = o1_ref[...].astype(jnp.float32)                      # (TB, D)
    o2 = o2_ref[...].astype(jnp.float32)                      # (TB, D)
    diff = o2 - o1
    distances = jnp.sum(diff * diff, axis=1, keepdims=True)   # (TB, 1) f32

    t = tgt_ref[...]                                          # (TB, 1) f32
    pos = jnp.maximum(distances - 0.25, 0.0)                  # relu(-0.25 + d)
    neg = jnp.maximum(MARGIN - jnp.sqrt(distances + EPS), 0.0)
    out_ref[...] = 0.5 * (t * pos + (1.0 - t) * neg * neg)


def _round_up(x, m):
    return ((x + m - 1) // m) * m


def _vmem_limit_bytes():
    """Scoped-VMEM limit = half of physical capacity (v5e/v6e: 64 MiB of 128,
    v7x: 32 MiB of 64). Falls back to the v7x-safe value if the query fails."""
    try:
        cap = int(pltpu.get_tpu_info().vmem_capacity_bytes)
    except Exception:
        cap = 64 * 1024 * 1024
    return max(cap // 2, 32 * 1024 * 1024)


def _pick_batch_tile(B, D, itemsize, vmem_budget):
    """Largest TB (multiple of 8) whose per-step VMEM footprint fits the budget:
    double-buffered native-dtype blocks for BOTH embeddings plus ~4 f32-width
    (TB, D) temporaries the kernel body materializes. Also capped so the grid
    keeps >= ~8 steps (pipelining + v7x two-TensorCore sharding) and so block
    DMAs stay on the measured HBM-roofline plateau."""
    per_row = 2 * 2 * D * itemsize + 4 * D * 4
    tb = vmem_budget // max(per_row, 1)
    tb = min(tb, _round_up(pl.cdiv(B, 8), 8))   # keep >= ~8 grid steps when B allows
    tb = min(tb, 1024)                          # ~85% of HBM roofline reached by 512-wide blocks
    tb = max(8, (tb // 8) * 8)
    return tb


def contrastive_loss(output1, output2, target):
    """output1, output2: (B, D) float (any float dtype); target: (B,) {0,1}.
    Returns the per-sample loss vector, shape (B,), float32 (the PyTorch
    forward ignores size_average and returns the unreduced losses)."""
    B, D = output1.shape
    itemsize = jnp.dtype(output1.dtype).itemsize

    # Tiny-batch corner case only: the minimum block height is 8 rows, so pad
    # the embeddings up to 8 rows when B < 8 (a handful of rows, negligible).
    o1, o2 = output1, output2
    B_in = B
    if B < 8:
        o1 = jnp.pad(o1, ((0, 8 - B), (0, 0)))
        o2 = jnp.pad(o2, ((0, 8 - B), (0, 0)))
        B_in = 8

    vmem_limit = _vmem_limit_bytes()
    TB = _pick_batch_tile(B_in, D, itemsize, (vmem_limit * 3) // 5)
    grid_b = pl.cdiv(B_in, TB)
    B_round = grid_b * TB

    # No jnp.pad of the big embeddings: the last tile is ragged. OOB input rows
    # read garbage that only produces garbage output rows (sliced off below);
    # there is no cross-row reduction, so correctness is unaffected. Only the
    # tiny (B, 1) target is padded to a whole number of tiles.
    tgt = target.reshape(B, 1).astype(jnp.float32)
    if B_round != B:
        tgt = jnp.pad(tgt, ((0, B_round - B), (0, 0)))

    cost = pl.CostEstimate(
        flops=3 * B * D + 8 * B,                 # sub, mul, add-reduce + epilogue
        transcendentals=B,                       # sqrt per row
        bytes_accessed=2 * B * D * itemsize + 2 * B_round * 4,
    )

    out = pl.pallas_call(
        _contrastive_loss_kernel,
        out_shape=jax.ShapeDtypeStruct((B_round, 1), jnp.float32),
        grid_spec=pltpu.PrefetchScalarGridSpec(
            num_scalar_prefetch=0,
            grid=(grid_b,),
            in_specs=[
                pl.BlockSpec((TB, D), lambda i: (i, 0)),
                pl.BlockSpec((TB, D), lambda i: (i, 0)),
                pl.BlockSpec((TB, 1), lambda i: (i, 0)),
            ],
            out_specs=pl.BlockSpec((TB, 1), lambda i: (i, 0)),
        ),
        compiler_params=pltpu.CompilerParams(
            dimension_semantics=("parallel",),   # v7x: shard batch tiles across both TCs
            vmem_limit_bytes=vmem_limit,
        ),
        cost_estimate=cost,
    )(o1, o2, tgt)

    return out[:B, 0]


def _reference(output1, output2, target):
    o1 = output1.astype(jnp.float32)
    o2 = output2.astype(jnp.float32)
    distances = jnp.sum((o2 - o1) ** 2, axis=1)
    t = target.astype(jnp.float32)
    pos = jnp.maximum(distances - 0.25, 0.0)
    neg = jnp.maximum(MARGIN - jnp.sqrt(distances + EPS), 0.0)
    return 0.5 * (t * pos + (1.0 - t) * neg ** 2)


if __name__ == "__main__":
    key = jax.random.PRNGKey(0)
    k1, k2, k3, k4, k5, k6 = jax.random.split(key, 6)

    # Small f32 case (single tile).
    B, D = 8, 32
    output1 = jax.random.normal(k1, (B, D), dtype=jnp.float32)
    output2 = jax.random.normal(k2, (B, D), dtype=jnp.float32)
    target = jax.random.bernoulli(k3, 0.5, (B,)).astype(jnp.int32)

    losses = contrastive_loss(output1, output2, target)
    jax.block_until_ready(losses)
    ref = _reference(output1, output2, target)
    assert losses.shape == (B,)
    assert jnp.allclose(losses, ref, atol=1e-5, rtol=1e-5), (losses, ref)

    # Ragged-last-tile + bf16 case (B not a multiple of the batch tile):
    # exercises the no-pad streaming path and the in-kernel f32 widening.
    B2, D2 = 20, 32
    o1b = jax.random.normal(k4, (B2, D2), dtype=jnp.bfloat16)
    o2b = jax.random.normal(k5, (B2, D2), dtype=jnp.bfloat16)
    tgt2 = jax.random.bernoulli(k6, 0.5, (B2,)).astype(jnp.int32)

    losses2 = contrastive_loss(o1b, o2b, tgt2)
    jax.block_until_ready(losses2)
    ref2 = _reference(o1b, o2b, tgt2)
    assert losses2.shape == (B2,)
    assert jnp.allclose(losses2, ref2, atol=1e-4, rtol=1e-4), (losses2, ref2)

    print("KERNEL_OK")
</pallas_src>

<mosaic_0001>
module attributes {stable_mosaic.version = 11 : i64} {
  func.func @_contrastive_loss_kernel(%arg0: i32, %arg1: memref<8x32xf32, #tpu.memory_space<vmem>>, %arg2: memref<8x32xf32, #tpu.memory_space<vmem>>, %arg3: memref<8x1xf32, #tpu.memory_space<vmem>>, %arg4: memref<8x1xf32, #tpu.memory_space<vmem>>) attributes {dimension_semantics = [#tpu.dimension_semantics<parallel>], iteration_bounds = array<i64: 1>, scalar_prefetch = 0 : i64, scratch_operands = 0 : i64, tpu.core_type = #tpu.core_type<tc>, window_params = [{transform_indices = @transform_0, window_bounds = array<i64: 8, 32>}, {transform_indices = @transform_1, window_bounds = array<i64: 8, 32>}, {transform_indices = @transform_2, window_bounds = array<i64: 8, 1>}, {transform_indices = @transform_3, window_bounds = array<i64: 8, 1>}]} {
    %c0 = arith.constant 0 : index
    %c0_0 = arith.constant 0 : index
    %0 = vector.load %arg1[%c0, %c0_0] : memref<8x32xf32, #tpu.memory_space<vmem>>, vector<8x32xf32>
    %c0_1 = arith.constant 0 : index
    %c0_2 = arith.constant 0 : index
    %1 = vector.load %arg2[%c0_1, %c0_2] : memref<8x32xf32, #tpu.memory_space<vmem>>, vector<8x32xf32>
    %2 = arith.subf %1, %0 : vector<8x32xf32>
    %3 = arith.mulf %2, %2 : vector<8x32xf32>
    %cst = arith.constant dense<0.000000e+00> : vector<8xf32>
    %4 = vector.multi_reduction <add>, %3, %cst [1] : vector<8x32xf32> to vector<8xf32>
    %5 = vector.shape_cast %4 : vector<8xf32> to vector<8x1xf32>
    %c0_3 = arith.constant 0 : index
    %c0_4 = arith.constant 0 : index
    %6 = vector.load %arg3[%c0_3, %c0_4] : memref<8x1xf32, #tpu.memory_space<vmem>>, vector<8x1xf32>
    %cst_5 = arith.constant 2.500000e-01 : f32
    %7 = vector.broadcast %cst_5 : f32 to vector<8x1xf32>
    %8 = arith.subf %5, %7 : vector<8x1xf32>
    %cst_6 = arith.constant 0.000000e+00 : f32
    %9 = vector.broadcast %cst_6 : f32 to vector<8x1xf32>
    %10 = arith.maximumf %8, %9 : vector<8x1xf32>
    %cst_7 = arith.constant 9.99999971E-10 : f32
    %11 = vector.broadcast %cst_7 : f32 to vector<8x1xf32>
    %12 = arith.addf %5, %11 : vector<8x1xf32>
    %13 = math.sqrt %12 : vector<8x1xf32>
    %cst_8 = arith.constant 5.000000e+00 : f32
    %14 = vector.broadcast %cst_8 : f32 to vector<8x1xf32>
    %15 = arith.subf %14, %13 : vector<8x1xf32>
    %cst_9 = arith.constant 0.000000e+00 : f32
    %16 = vector.broadcast %cst_9 : f32 to vector<8x1xf32>
    %17 = arith.maximumf %15, %16 : vector<8x1xf32>
    %18 = arith.mulf %6, %10 : vector<8x1xf32>
    %cst_10 = arith.constant 1.000000e+00 : f32
    %19 = vector.broadcast %cst_10 : f32 to vector<8x1xf32>
    %20 = arith.subf %19, %6 : vector<8x1xf32>
    %21 = arith.mulf %20, %17 : vector<8x1xf32>
    %22 = arith.mulf %21, %17 : vector<8x1xf32>
    %23 = arith.addf %18, %22 : vector<8x1xf32>
    %cst_11 = arith.constant 5.000000e-01 : f32
    %24 = vector.broadcast %cst_11 : f32 to vector<8x1xf32>
    %25 = arith.mulf %24, %23 : vector<8x1xf32>
    %c0_12 = arith.constant 0 : index
    %c0_13 = arith.constant 0 : index
    %26 = vector.load %arg4[%c0_12, %c0_13] : memref<8x1xf32, #tpu.memory_space<vmem>>, vector<8x1xf32>
    tpu.vector_store %arg4[%c0_12, %c0_13], %25 {strides = array<i32>} : memref<8x1xf32, #tpu.memory_space<vmem>>, vector<8x1xf32>,
    return
  }
  func.func @transform_0(%arg0: i32) -> (i32, i32) {
    %c0_i32 = arith.constant 0 : i32
    %c0_i32_0 = arith.constant 0 : i32
    return %arg0, %c0_i32 : i32, i32
  }
  func.func @transform_1(%arg0: i32) -> (i32, i32) {
    %c0_i32 = arith.constant 0 : i32
    %c0_i32_0 = arith.constant 0 : i32
    return %arg0, %c0_i32 : i32, i32
  }
  func.func @transform_2(%arg0: i32) -> (i32, i32) {
    %c0_i32 = arith.constant 0 : i32
    %c0_i32_0 = arith.constant 0 : i32
    return %arg0, %c0_i32 : i32, i32
  }
  func.func @transform_3(%arg0: i32) -> (i32, i32) {
    %c0_i32 = arith.constant 0 : i32
    %c0_i32_0 = arith.constant 0 : i32
    return %arg0, %c0_i32 : i32, i32
  }
}

</mosaic_0001>

<llo_original>
// kernel: tpu_custom_call.1
$region0: #{tpu_custom_call.1}
  #allocation0 [shape = 'u32[]', space=smem, size = 0x4, offset = 0x4, fixed_abs, tag = 'smem constant byte address 0x4 - core index']
  #allocation1 [shape = 'u32[72,128]{1,0:T(1,128)}', space=vmem, size = 0x9000, scoped, tag = 'internal scratch']
  %s0 = inlined_call_operand.vmem [shape: f32[8,32], index: 0, kind: input, shape index: {}]
  %s1 = inlined_call_operand.hbm [shape: f32[8,32], index: 1, kind: input, shape index: {}]
  %s2 = inlined_call_operand.vmem [shape: f32[8,1], index: 2, kind: input, shape index: {}]
  %s3 = inlined_call_operand.vmem [shape: f32[8,1], index: 3, kind: output, shape index: {}]
  %s4 = sld [smem:[#allocation0]]
  $region26: #{tpu_custom_call.1} parent=0
    _
  %s6 = ssub.s32 1, %s4
  %s7 = scalar_select 0, %s6, %s4
  $region1: #{tpu_custom_call.1} parent=0
    #allocation2 [shape = 'u8[4096]{0}', space=vmem, size = 0x1000, scoped, tag = 'input window, operand 1, single buffered']
    #allocation3 [shape = 's32[1]{0}', space=sflag, size = 0x4, scoped, tag = 'scoped memory for tpu_custom_call.1']
    %8 = vsyncpa [#allocation3], 0
    // Predicated region
    $region2: #{tpu_custom_call.1} parent=1 // pred_check
      _
    $region3: #{tpu_custom_call.1} parent=1 // pred_check_branch
      %10 = sbr.rel (0) target = $region5
    $region4: #{tpu_custom_call.1} parent=1 // pred_region
      _
    $region5: #{tpu_custom_call.1} parent=1 // pred_fallthru
      _
    // Predicated region
    $region6: #{tpu_custom_call.1} parent=1 // pred_check
      _
    $region7: #{tpu_custom_call.1} parent=1 // pred_check_branch
      %12 = sbr.rel (0) target = $region9
    $region8: #{tpu_custom_call.1} parent=1 // pred_region
      %14 = vsyncadd [#allocation3], 0
      %s16 = sshll.u32 %s1, 4
      %s17 = int_to_ptr.hbm [resolvable:$true] %s16
      %s18 = sshll.u32 [#allocation2], 4
      %s19 = int_to_ptr.vmem [resolvable:$true] %s18
      %21 = dma.hbm_to_vmem [thread:$0]  %s17, 128, %s19, [#allocation3]
    $region9: #{tpu_custom_call.1} parent=1 // pred_fallthru
      _
    // Predicated region
    $region10: #{tpu_custom_call.1} parent=1 // pred_check
      _
    $region11: #{tpu_custom_call.1} parent=1 // pred_check_branch
      %23 = sbr.rel (0) target = $region13
    $region12: #{tpu_custom_call.1} parent=1 // pred_region
      _
    $region13: #{tpu_custom_call.1} parent=1 // pred_fallthru
      _
    // Predicated region
    $region14: #{tpu_custom_call.1} parent=1 // pred_check
      _
    $region15: #{tpu_custom_call.1} parent=1 // pred_check_branch
      %25 = sbr.rel (0) target = $region17
    $region16: #{tpu_custom_call.1} parent=1 // pred_region
      %27 = dma.done [#allocation3], 128
    $region17: #{tpu_custom_call.1} parent=1 // pred_fallthru
      _
    %v28 = vld [vmem:[%s0] sm:$0xff]
    %v29 = vld [vmem:[#allocation2] sm:$0xff]
    %v30 = vsub.f32 %v29, %v28
    %v31 = vmul.f32 %v30, %v30
    %vm32 = vcmask 261120
    %v33 = vsel %vm32, %v31, 0.0
    %34 = vadd.xlane.f32.xlu0 %v33
    %v35 = vpop.xlane.xlu0 %34
    %v36 = vld [vmem:[%s2] sm:$0xff]
    %v37 = vsub.f32 %v35, 0.25
    %v38 = vmax.f32 %v37, 0.0
    %v39 = vadd.f32 %v35, 1e-09
    %v40 = vrsqrt.pop %v39
    %v41 = vmul.f32 %v40, %v39
    %v42 = vmul.f32 %v41, %v40
    %v43 = vmul.f32 0.5, %v42
    %v44 = vsub.f32 1.5, %v43
    %v45 = vmul.f32 %v40, %v44
    %v46 = vmul.f32 %v39, %v45
    %vm47 = vcmp.eq.f32.partialorder %v39, inf
    %v48 = vsel %vm47, %v39, %v46
    %vm49 = vcmp.eq.f32.partialorder %v39, 0.0
    %v50 = vand.u32 %v39, 2147483648
    %v51 = vsel %vm49, %v50, %v48
    %v52 = vsub.f32 5.0, %v51
    %v53 = vmax.f32 %v52, 0.0
    %v54 = vmul.f32 %v36, %v38
    %v55 = vsub.f32 1.0, %v36
    %v56 = vmul.f32 %v55, %v53
    %v57 = vmul.f32 %v56, %v53
    %v58 = vadd.f32 %v54, %v57
    %v59 = vmul.f32 %v58, 0.5
    %vm60 = vcmask 7168
    %61 = vst.msk [vmem:[%s3] sm:$0xff] %vm60, %v59
    // Predicated region
    $region18: #{tpu_custom_call.1} parent=1 // pred_check
      _
    $region19: #{tpu_custom_call.1} parent=1 // pred_check_branch
      %63 = sbr.rel (0) target = $region21
    $region20: #{tpu_custom_call.1} parent=1 // pred_region
      _
    $region21: #{tpu_custom_call.1} parent=1 // pred_fallthru
      _
    // Predicated region
    $region22: #{tpu_custom_call.1} parent=1 // pred_check
      _
    $region23: #{tpu_custom_call.1} parent=1 // pred_check_branch
      %65 = sbr.rel (0) target = $region25
    $region24: #{tpu_custom_call.1} parent=1 // pred_region
      _
    $region25: #{tpu_custom_call.1} parent=1 // pred_fallthru
      _
    %66 = vsyncpa [#allocation3], 1

</llo_original>
